<compile_context>
chip_gen: v7x
topology: tpu7x:2x2x1
jax: 0.10.0
libtpu: 0.0.40
codegen_flags: <defaults>
</compile_context>

<pallas_src>
import functools
import math

import jax
import jax.numpy as jnp
from jax.experimental import pallas as pl
from jax.experimental.pallas import tpu as pltpu


# ----------------------------------------------------------------------------
# helpers
# ----------------------------------------------------------------------------
def _tile(dim, target, align):
    """Largest multiple of `align` <= target that divides `dim`; else `dim`."""
    if dim <= target:
        return dim
    t = (target // align) * align
    while t >= align:
        if dim % t == 0:
            return t
        t -= align
    return dim


def _gelu_f32(y):
    # TODO(synk): reference BERT uses exact erf-GELU; tanh approximation kept
    # for robust Mosaic lowering.
    c = math.sqrt(2.0 / math.pi)
    return 0.5 * y * (1.0 + jnp.tanh(c * (y + 0.044715 * y * y * y)))


# ----------------------------------------------------------------------------
# tiled dense: out = act(x @ w + b)
# ----------------------------------------------------------------------------
def _dense_kernel(x_ref, w_ref, b_ref, o_ref, acc_ref, *, activation):
    k = pl.program_id(2)

    @pl.when(k == 0)
    def _():
        acc_ref[...] = jnp.zeros_like(acc_ref)

    acc_ref[...] += jnp.dot(x_ref[...], w_ref[...],
                            preferred_element_type=jnp.float32)

    @pl.when(k == pl.num_programs(2) - 1)
    def _():
        y = acc_ref[...] + b_ref[...]              # f32 epilogue
        if activation == "gelu":
            y = _gelu_f32(y)
        elif activation == "tanh":
            y = jnp.tanh(y)
        o_ref[...] = y.astype(o_ref.dtype)


def dense(x, w, b, activation="none", out_dtype=jnp.bfloat16,
          tm=256, tn=256, tk=256):
    M, K = x.shape
    N = w.shape[1]
    TM = _tile(M, tm, 8)
    TN = _tile(N, tn, 128)
    TK = _tile(K, tk, 128)
    b2 = b.reshape(1, N).astype(jnp.float32)
    return pl.pallas_call(
        functools.partial(_dense_kernel, activation=activation),
        out_shape=jax.ShapeDtypeStruct((M, N), out_dtype),
        grid_spec=pltpu.PrefetchScalarGridSpec(
            num_scalar_prefetch=0,
            grid=(M // TM, N // TN, K // TK),
            in_specs=[pl.BlockSpec((TM, TK), lambda i, j, k: (i, k)),
                      pl.BlockSpec((TK, TN), lambda i, j, k: (k, j)),
                      pl.BlockSpec((1, TN), lambda i, j, k: (0, j))],
            out_specs=pl.BlockSpec((TM, TN), lambda i, j, k: (i, j)),
            scratch_shapes=[pltpu.VMEM((TM, TN), jnp.float32)]),
        compiler_params=pltpu.CompilerParams(
            dimension_semantics=("parallel", "parallel", "arbitrary")),
    )(x, w, b2)


# ----------------------------------------------------------------------------
# tiled dense + residual add + LayerNorm fused epilogue
#   out = LayerNorm((x @ w + b) + residual) * gamma + beta
# (TN = full N so the LN reduction sees the whole hidden row)
# ----------------------------------------------------------------------------
def _dense_add_ln_kernel(x_ref, w_ref, b_ref, r_ref, g_ref, be_ref,
                         o_ref, acc_ref, *, eps):
    k = pl.program_id(1)

    @pl.when(k == 0)
    def _():
        acc_ref[...] = jnp.zeros_like(acc_ref)

    acc_ref[...] += jnp.dot(x_ref[...], w_ref[...],
                            preferred_element_type=jnp.float32)

    @pl.when(k == pl.num_programs(1) - 1)
    def _():
        h = acc_ref[...] + b_ref[...] + r_ref[...].astype(jnp.float32)
        mu = jnp.mean(h, axis=-1, keepdims=True)
        var = jnp.mean(jnp.square(h - mu), axis=-1, keepdims=True)
        y = (h - mu) * jax.lax.rsqrt(var + eps) * g_ref[...] + be_ref[...]
        o_ref[...] = y.astype(o_ref.dtype)


def dense_add_ln(x, w, b, residual, gamma, beta, eps=1e-12,
                 out_dtype=jnp.bfloat16, tm=256, tk=256):
    M, K = x.shape
    N = w.shape[1]
    TM = _tile(M, tm, 8)
    TK = _tile(K, tk, 128)
    b2 = b.reshape(1, N).astype(jnp.float32)
    return pl.pallas_call(
        functools.partial(_dense_add_ln_kernel, eps=eps),
        out_shape=jax.ShapeDtypeStruct((M, N), out_dtype),
        grid_spec=pltpu.PrefetchScalarGridSpec(
            num_scalar_prefetch=0,
            grid=(M // TM, K // TK),
            in_specs=[pl.BlockSpec((TM, TK), lambda i, k: (i, k)),
                      pl.BlockSpec((TK, N), lambda i, k: (k, 0)),
                      pl.BlockSpec((1, N), lambda i, k: (0, 0)),
                      pl.BlockSpec((TM, N), lambda i, k: (i, 0)),
                      pl.BlockSpec((1, N), lambda i, k: (0, 0)),
                      pl.BlockSpec((1, N), lambda i, k: (0, 0))],
            out_specs=pl.BlockSpec((TM, N), lambda i, k: (i, 0)),
            scratch_shapes=[pltpu.VMEM((TM, N), jnp.float32)]),
        compiler_params=pltpu.CompilerParams(
            dimension_semantics=("parallel", "arbitrary")),
    )(x, w, b2, residual, gamma, beta)


# ----------------------------------------------------------------------------
# fully fused FFN block:
#   out = LayerNorm(gelu(x @ wi + bi) @ wf + bf + x) * gamma + beta
# Grid (row-blocks, intermediate-blocks); the intermediate activation never
# touches HBM.  The residual is the resident x block itself.
# ----------------------------------------------------------------------------
def _ffn_kernel(x_ref, wi_ref, bi_ref, wf_ref, bf_ref, g_ref, be_ref,
                o_ref, acc_ref, *, eps):
    j = pl.program_id(1)

    @pl.when(j == 0)
    def _():
        acc_ref[...] = jnp.zeros_like(acc_ref)

    inter = jnp.dot(x_ref[...], wi_ref[...],
                    preferred_element_type=jnp.float32)          # (TM, TI)
    inter = _gelu_f32(inter + bi_ref[...])
    acc_ref[...] += jnp.dot(inter.astype(x_ref.dtype), wf_ref[...],
                            preferred_element_type=jnp.float32)  # (TM, H)

    @pl.when(j == pl.num_programs(1) - 1)
    def _():
        h = acc_ref[...] + bf_ref[...] + x_ref[...].astype(jnp.float32)
        mu = jnp.mean(h, axis=-1, keepdims=True)
        var = jnp.mean(jnp.square(h - mu), axis=-1, keepdims=True)
        y = (h - mu) * jax.lax.rsqrt(var + eps) * g_ref[...] + be_ref[...]
        o_ref[...] = y.astype(o_ref.dtype)


def ffn_fused(x, wi, bi, wf, bf, gamma, beta, eps=1e-12,
              out_dtype=jnp.bfloat16, tm=256, ti=512):
    M, H = x.shape
    I = wi.shape[1]
    TM = _tile(M, tm, 8)
    TI = _tile(I, ti, 128)
    bi2 = bi.reshape(1, I).astype(jnp.float32)
    bf2 = bf.reshape(1, H).astype(jnp.float32)
    return pl.pallas_call(
        functools.partial(_ffn_kernel, eps=eps),
        out_shape=jax.ShapeDtypeStruct((M, H), out_dtype),
        grid_spec=pltpu.PrefetchScalarGridSpec(
            num_scalar_prefetch=0,
            grid=(M // TM, I // TI),
            in_specs=[pl.BlockSpec((TM, H), lambda i, j: (i, 0)),
                      pl.BlockSpec((H, TI), lambda i, j: (0, j)),
                      pl.BlockSpec((1, TI), lambda i, j: (0, j)),
                      pl.BlockSpec((TI, H), lambda i, j: (j, 0)),
                      pl.BlockSpec((1, H), lambda i, j: (0, 0)),
                      pl.BlockSpec((1, H), lambda i, j: (0, 0)),
                      pl.BlockSpec((1, H), lambda i, j: (0, 0))],
            out_specs=pl.BlockSpec((TM, H), lambda i, j: (i, 0)),
            scratch_shapes=[pltpu.VMEM((TM, H), jnp.float32)]),
        compiler_params=pltpu.CompilerParams(
            dimension_semantics=("parallel", "arbitrary")),
    )(x, wi, bi2, wf, bf2, gamma, beta)


# ----------------------------------------------------------------------------
# standalone LayerNorm (embedding LN) — tiled over rows
# ----------------------------------------------------------------------------
def _ln_kernel(x_ref, g_ref, b_ref, o_ref, *, eps):
    h = x_ref[...].astype(jnp.float32)
    mu = jnp.mean(h, axis=-1, keepdims=True)
    var = jnp.mean(jnp.square(h - mu), axis=-1, keepdims=True)
    o_ref[...] = ((h - mu) * jax.lax.rsqrt(var + eps) * g_ref[...]
                  + b_ref[...]).astype(o_ref.dtype)


def layernorm(x, gamma, beta, eps=1e-12, out_dtype=jnp.bfloat16, tm=512):
    M, H = x.shape
    TM = _tile(M, tm, 8)
    return pl.pallas_call(
        functools.partial(_ln_kernel, eps=eps),
        out_shape=jax.ShapeDtypeStruct((M, H), out_dtype),
        grid_spec=pltpu.PrefetchScalarGridSpec(
            num_scalar_prefetch=0,
            grid=(M // TM,),
            in_specs=[pl.BlockSpec((TM, H), lambda i: (i, 0)),
                      pl.BlockSpec((1, H), lambda i: (0, 0)),
                      pl.BlockSpec((1, H), lambda i: (0, 0))],
            out_specs=pl.BlockSpec((TM, H), lambda i: (i, 0))),
        compiler_params=pltpu.CompilerParams(
            dimension_semantics=("parallel",)),
    )(x, gamma, beta)


# ----------------------------------------------------------------------------
# flash-style multi-head attention over the fused (B, S, 3H) QKV tensor.
#   grid (batch, q-blocks, kv-blocks); q/k/v are distinct column blocks of the
#   same HBM array (no XLA slice copies); online softmax scratch in VMEM.
# ----------------------------------------------------------------------------
def _flash_attn_kernel(q_ref, k_ref, v_ref, m_ref, o_ref,
                       m_sc, l_sc, acc_sc, *, num_heads, scale):
    kv = pl.program_id(2)

    @pl.when(kv == 0)
    def _():
        m_sc[...] = jnp.full_like(m_sc, -1e30)
        l_sc[...] = jnp.zeros_like(l_sc)
        acc_sc[...] = jnp.zeros_like(acc_sc)

    q = q_ref[0]                      # (TQ, H) bf16
    k = k_ref[0]                      # (TK, H) bf16
    v = v_ref[0]                      # (TK, H) bf16
    mask = m_ref[0]                   # (1, TK) f32 additive mask

    H = q.shape[-1]
    Dh = H // num_heads

    for h in range(num_heads):
        sl = slice(h * Dh, (h + 1) * Dh)
        # scores = q_h @ k_h^T  (contract head_dim), f32 accumulate on MXU
        s = jax.lax.dot_general(q[:, sl], k[:, sl],
                                (((1,), (1,)), ((), ())),
                                preferred_element_type=jnp.float32)
        s = s * scale + mask                                   # (TQ, TK)
        m_prev = m_sc[:, h:h + 1]                              # (TQ, 1)
        m_new = jnp.maximum(m_prev, jnp.max(s, axis=-1, keepdims=True))
        alpha = jnp.exp(m_prev - m_new)
        p = jnp.exp(s - m_new)
        l_sc[:, h:h + 1] = alpha * l_sc[:, h:h + 1] + jnp.sum(
            p, axis=-1, keepdims=True)
        acc_sc[:, sl] = alpha * acc_sc[:, sl] + jnp.dot(
            p.astype(v.dtype), v[:, sl], preferred_element_type=jnp.float32)
        m_sc[:, h:h + 1] = m_new

    @pl.when(kv == pl.num_programs(2) - 1)
    def _():
        inv = pl.reciprocal(l_sc[...], approx=True)            # (TQ, nh)
        parts = []
        for h in range(num_heads):
            sl = slice(h * Dh, (h + 1) * Dh)
            parts.append(acc_sc[:, sl] * inv[:, h:h + 1])
        o_ref[0] = jnp.concatenate(parts, axis=-1).astype(o_ref.dtype)


def flash_attention(qkv, add_mask, num_heads):
    B, S, H3 = qkv.shape
    H = H3 // 3
    Dh = H // num_heads
    scale = 1.0 / math.sqrt(Dh)
    TQ = _tile(S, 256, 8)
    TK = _tile(S, 512, 128)
    return pl.pallas_call(
        functools.partial(_flash_attn_kernel, num_heads=num_heads, scale=scale),
        out_shape=jax.ShapeDtypeStruct((B, S, H), jnp.bfloat16),
        grid_spec=pltpu.PrefetchScalarGridSpec(
            num_scalar_prefetch=0,
            grid=(B, S // TQ, S // TK),
            in_specs=[
                # q / k / v are column blocks 0 / 1 / 2 of the same array
                pl.BlockSpec((1, TQ, H), lambda b, qi, ki: (b, qi, 0)),
                pl.BlockSpec((1, TK, H), lambda b, qi, ki: (b, ki, 1)),
                pl.BlockSpec((1, TK, H), lambda b, qi, ki: (b, ki, 2)),
                pl.BlockSpec((1, 1, TK), lambda b, qi, ki: (b, 0, ki))],
            out_specs=pl.BlockSpec((1, TQ, H), lambda b, qi, ki: (b, qi, 0)),
            scratch_shapes=[pltpu.VMEM((TQ, num_heads), jnp.float32),
                            pltpu.VMEM((TQ, num_heads), jnp.float32),
                            pltpu.VMEM((TQ, H), jnp.float32)]),
        compiler_params=pltpu.CompilerParams(
            dimension_semantics=("parallel", "parallel", "arbitrary")),
    )(qkv, qkv, qkv, add_mask)


# ----------------------------------------------------------------------------
# model (parameters + forward)
# ----------------------------------------------------------------------------
def init_params(key, vocab=128, max_pos=64, hidden=128, num_heads=4,
                intermediate=256, num_layers=2):
    keys = iter(jax.random.split(key, 64))

    def w(shape, scale=0.02):
        return (jax.random.normal(next(keys), shape, jnp.float32)
                * scale).astype(jnp.bfloat16)

    def zeros(shape):
        return jnp.zeros(shape, jnp.float32)

    def ones(shape):
        return jnp.ones(shape, jnp.float32)

    params = {
        "word_emb": w((vocab, hidden)),
        "pos_emb": w((max_pos, hidden)),
        "type_emb": w((2, hidden)),
        "emb_ln_g": ones((1, hidden)),
        "emb_ln_b": zeros((1, hidden)),
        "layers": [],
        "pool_w": w((hidden, hidden)),
        "pool_b": zeros((hidden,)),
        "cls_w": w((hidden, 2)),          # num_labels = 2 (logits[:, 1] is used)
        "cls_b": zeros((2,)),
        # NOTE: MonoBERT.__init__ also defines `self.scoring = nn.Linear(dim, 1)`
        # but it is unused in forward(); omitted here on purpose.
    }
    for _ in range(num_layers):
        params["layers"].append({
            # fused Q|K|V projection: one (H, 3H) matmul per layer
            "qkv_w": w((hidden, 3 * hidden)), "qkv_b": zeros((3 * hidden,)),
            "o_w": w((hidden, hidden)), "o_b": zeros((hidden,)),
            "ln1_g": ones((1, hidden)), "ln1_b": zeros((1, hidden)),
            "i_w": w((hidden, intermediate)), "i_b": zeros((intermediate,)),
            "f_w": w((intermediate, hidden)), "f_b": zeros((hidden,)),
            "ln2_g": ones((1, hidden)), "ln2_b": zeros((1, hidden)),
        })
    return params


def _encoder_layer(x2, add_mask, p, B, S, num_heads):
    H = x2.shape[1]

    # fused QKV projection: (B*S, 3H) bf16, consumed directly by attention
    qkv = dense(x2, p["qkv_w"], p["qkv_b"])
    ctx = flash_attention(qkv.reshape(B, S, 3 * H), add_mask, num_heads)
    ctx2 = ctx.reshape(B * S, H)

    # attention output projection + residual + LayerNorm fused
    x2 = dense_add_ln(ctx2, p["o_w"], p["o_b"], x2, p["ln1_g"], p["ln1_b"])

    # whole FFN (up-proj GELU, down-proj, residual, LN) in one kernel
    x2 = ffn_fused(x2, p["i_w"], p["i_b"], p["f_w"], p["f_b"],
                   p["ln2_g"], p["ln2_b"])
    return x2


def monobert_forward(params, input_ids, token_type_ids, attention_mask,
                     labels=None, num_heads=4):
    B, S = input_ids.shape
    H = params["word_emb"].shape[1]

    # embeddings (gathers are plain-JAX glue), kept in bf16
    emb = (params["word_emb"][input_ids]
           + params["pos_emb"][jnp.arange(S)][None, :, :]
           + params["type_emb"][token_type_ids])
    x2 = layernorm(emb.reshape(B * S, H),
                   params["emb_ln_g"], params["emb_ln_b"])       # bf16

    # additive attention mask, (B, 1, S) f32 — indexed per batch by the kernel
    add_mask = ((1.0 - attention_mask.astype(jnp.float32)) * -1e9
                ).reshape(B, 1, S)

    for layer in params["layers"]:
        x2 = _encoder_layer(x2, add_mask, layer, B, S, num_heads)

    cls_tok = x2.reshape(B, S, H)[:, 0, :]                        # [CLS], (B, H)
    pooled = dense(cls_tok, params["pool_w"], params["pool_b"],
                   activation="tanh")

    # tiny (H, 2) classification head + sigmoid/loss in plain JAX
    logits2 = (pooled.astype(jnp.float32)
               @ params["cls_w"].astype(jnp.float32)
               + params["cls_b"])                                 # (B, 2)
    z = logits2[:, 1]                                             # (B,)
    probs = jax.nn.sigmoid(z)

    if labels is not None:
        y = labels.astype(jnp.float32).reshape(-1)
        # numerically-stable form of
        #   -sum(log(sigmoid(z)) * y) - sum(log(1 - sigmoid(z)) * (1 - y))
        loss = jnp.sum(jax.nn.softplus(-z) * y + jax.nn.softplus(z) * (1.0 - y))
        return loss
    return probs                                                  # (B,)


# ----------------------------------------------------------------------------
# main
# ----------------------------------------------------------------------------
if __name__ == "__main__":
    key = jax.random.PRNGKey(0)
    pkey, dkey = jax.random.split(key)

    B, S = 2, 8
    VOCAB, HIDDEN, HEADS = 128, 128, 4

    params = init_params(pkey, vocab=VOCAB, hidden=HIDDEN, num_heads=HEADS,
                         intermediate=256, num_layers=2)

    input_ids = jax.random.randint(dkey, (B, S), 0, VOCAB, dtype=jnp.int32)
    token_type_ids = jnp.concatenate(
        [jnp.zeros((B, S // 2), jnp.int32), jnp.ones((B, S // 2), jnp.int32)],
        axis=1)
    attention_mask = jnp.ones((B, S), jnp.int32).at[1, -2:].set(0)  # pad row 1 tail

    scores = monobert_forward(params, input_ids, token_type_ids, attention_mask,
                              num_heads=HEADS)
    jax.block_until_ready(scores)

    # also exercise the labels / loss path
    labels = jnp.array([1.0, 0.0], jnp.float32)
    loss = monobert_forward(params, input_ids, token_type_ids, attention_mask,
                            labels=labels, num_heads=HEADS)
    jax.block_until_ready(loss)

    print("KERNEL_OK")
</pallas_src>

<mosaic_0001>
module attributes {stable_mosaic.version = 11 : i64} {
  func.func @_ln_kernel(%arg0: i32, %arg1: memref<16x128xbf16, #tpu.memory_space<vmem>>, %arg2: memref<1x128xf32, #tpu.memory_space<vmem>>, %arg3: memref<1x128xf32, #tpu.memory_space<vmem>>, %arg4: memref<16x128xbf16, #tpu.memory_space<vmem>>) attributes {dimension_semantics = [#tpu.dimension_semantics<parallel>], iteration_bounds = array<i64: 1>, scalar_prefetch = 0 : i64, scratch_operands = 0 : i64, tpu.core_type = #tpu.core_type<tc>, window_params = [{transform_indices = @transform_0, window_bounds = array<i64: 16, 128>}, {pipeline_mode = #tpu.pipeline_mode<synchronous>, transform_indices = @transform_1, window_bounds = array<i64: 1, 128>}, {pipeline_mode = #tpu.pipeline_mode<synchronous>, transform_indices = @transform_2, window_bounds = array<i64: 1, 128>}, {transform_indices = @transform_3, window_bounds = array<i64: 16, 128>}]} {
    %c0 = arith.constant 0 : index
    %c0_0 = arith.constant 0 : index
    %0 = vector.load %arg1[%c0, %c0_0] : memref<16x128xbf16, #tpu.memory_space<vmem>>, vector<16x128xbf16>
    %1 = arith.extf %0 : vector<16x128xbf16> to vector<16x128xf32>
    %cst = arith.constant dense<0.000000e+00> : vector<16xf32>
    %2 = vector.multi_reduction <add>, %1, %cst [1] : vector<16x128xf32> to vector<16xf32>
    %3 = vector.shape_cast %2 : vector<16xf32> to vector<16x1xf32>
    %cst_1 = arith.constant 1.280000e+02 : f32
    %4 = vector.broadcast %cst_1 : f32 to vector<16x1xf32>
    %5 = arith.divf %3, %4 : vector<16x1xf32>
    %6 = vector.broadcast %5 : vector<16x1xf32> to vector<16x128xf32>
    %7 = arith.subf %1, %6 : vector<16x128xf32>
    %8 = arith.mulf %7, %7 : vector<16x128xf32>
    %cst_2 = arith.constant dense<0.000000e+00> : vector<16xf32>
    %9 = vector.multi_reduction <add>, %8, %cst_2 [1] : vector<16x128xf32> to vector<16xf32>
    %10 = vector.shape_cast %9 : vector<16xf32> to vector<16x1xf32>
    %cst_3 = arith.constant 1.280000e+02 : f32
    %11 = vector.broadcast %cst_3 : f32 to vector<16x1xf32>
    %12 = arith.divf %10, %11 : vector<16x1xf32>
    %13 = vector.broadcast %5 : vector<16x1xf32> to vector<16x128xf32>
    %14 = arith.subf %1, %13 : vector<16x128xf32>
    %cst_4 = arith.constant 9.99999996E-13 : f32
    %15 = vector.broadcast %cst_4 : f32 to vector<16x1xf32>
    %16 = arith.addf %12, %15 : vector<16x1xf32>
    %17 = math.rsqrt %16 : vector<16x1xf32>
    %18 = vector.broadcast %17 : vector<16x1xf32> to vector<16x128xf32>
    %19 = arith.mulf %14, %18 : vector<16x128xf32>
    %c0_5 = arith.constant 0 : index
    %c0_6 = arith.constant 0 : index
    %20 = vector.load %arg2[%c0_5, %c0_6] : memref<1x128xf32, #tpu.memory_space<vmem>>, vector<1x128xf32>
    %21 = vector.broadcast %20 : vector<1x128xf32> to vector<16x128xf32>
    %22 = arith.mulf %19, %21 : vector<16x128xf32>
    %c0_7 = arith.constant 0 : index
    %c0_8 = arith.constant 0 : index
    %23 = vector.load %arg3[%c0_7, %c0_8] : memref<1x128xf32, #tpu.memory_space<vmem>>, vector<1x128xf32>
    %24 = vector.broadcast %23 : vector<1x128xf32> to vector<16x128xf32>
    %25 = arith.addf %22, %24 : vector<16x128xf32>
    %26 = arith.truncf %25 : vector<16x128xf32> to vector<16x128xbf16>
    %c0_9 = arith.constant 0 : index
    %c0_10 = arith.constant 0 : index
    %27 = vector.load %arg4[%c0_9, %c0_10] : memref<16x128xbf16, #tpu.memory_space<vmem>>, vector<16x128xbf16>
    tpu.vector_store %arg4[%c0_9, %c0_10], %26 {strides = array<i32>} : memref<16x128xbf16, #tpu.memory_space<vmem>>, vector<16x128xbf16>,
    return
  }
  func.func @transform_0(%arg0: i32) -> (i32, i32) {
    %c0_i32 = arith.constant 0 : i32
    %c0_i32_0 = arith.constant 0 : i32
    return %arg0, %c0_i32 : i32, i32
  }
  func.func @transform_1(%arg0: i32) -> (i32, i32) {
    %c0_i32 = arith.constant 0 : i32
    %c0_i32_0 = arith.constant 0 : i32
    %c0_i32_1 = arith.constant 0 : i32
    return %c0_i32, %c0_i32_0 : i32, i32
  }
  func.func @transform_2(%arg0: i32) -> (i32, i32) {
    %c0_i32 = arith.constant 0 : i32
    %c0_i32_0 = arith.constant 0 : i32
    %c0_i32_1 = arith.constant 0 : i32
    return %c0_i32, %c0_i32_0 : i32, i32
  }
  func.func @transform_3(%arg0: i32) -> (i32, i32) {
    %c0_i32 = arith.constant 0 : i32
    %c0_i32_0 = arith.constant 0 : i32
    return %arg0, %c0_i32 : i32, i32
  }
}

</mosaic_0001>

<llo_original>
// kernel: tpu_custom_call.1
$region0: #{tpu_custom_call.1}
  #allocation0 [shape = 'u32[]', space=smem, size = 0x4, offset = 0x4, fixed_abs, tag = 'smem constant byte address 0x4 - core index']
  #allocation1 [shape = 'u32[144,128]{1,0:T(1,128)}', space=vmem, size = 0x12000, scoped, tag = 'internal scratch']
  %s0 = inlined_call_operand.hbm [shape: bf16[16,128], index: 0, kind: input, shape index: {}]
  %s1 = inlined_call_operand.vmem [shape: f32[1,128], index: 1, kind: input, shape index: {}]
  %s2 = inlined_call_operand.vmem [shape: f32[1,128], index: 2, kind: input, shape index: {}]
  %s3 = inlined_call_operand.hbm [shape: bf16[16,128], index: 3, kind: output, shape index: {}]
  %s4 = sld [smem:[#allocation0]]
  $region26: #{tpu_custom_call.1} parent=0
    _
  %s6 = ssub.s32 1, %s4
  %s7 = scalar_select 0, %s6, %s4
  $region1: #{tpu_custom_call.1} parent=0
    #allocation2 [shape = 'u8[4096]{0}', space=vmem, size = 0x1000, scoped, tag = 'input window, operand 0, single buffered']
    #allocation3 [shape = 's32[1]{0}', space=sflag, size = 0x4, scoped, tag = 'scoped memory for tpu_custom_call.1']
    #allocation4 [shape = 's32[1]{0}', space=sflag, size = 0x4, scoped, tag = 'scoped memory for tpu_custom_call.1']
    #allocation5 [shape = 'u8[4096]{0}', space=vmem, size = 0x1000, scoped, tag = 'output window, operand 0, single buffered']
    %8 = vsyncpa [#allocation3], 0
    %9 = vsyncpa [#allocation4], 0
    // Predicated region
    $region2: #{tpu_custom_call.1} parent=1 // pred_check
      _
    $region3: #{tpu_custom_call.1} parent=1 // pred_check_branch
      %11 = sbr.rel (0) target = $region5
    $region4: #{tpu_custom_call.1} parent=1 // pred_region
      %s13 = ssub.s32 128, 128
      %14 = vsyncadd [#allocation3], %s13
      %s15 = sshll.u32 [#allocation2], 4
      %s16 = int_to_ptr.vmem [resolvable:$true] %s15
      %21 = dma.hbm_to_vmem [thread:$0]  %s0, 128, %s16, [#allocation3], 64, 64, 4
    $region5: #{tpu_custom_call.1} parent=1 // pred_fallthru
      _
    // Predicated region
    $region6: #{tpu_custom_call.1} parent=1 // pred_check
      _
    $region7: #{tpu_custom_call.1} parent=1 // pred_check_branch
      %23 = sbr.rel (0) target = $region9
    $region8: #{tpu_custom_call.1} parent=1 // pred_region
      _
    $region9: #{tpu_custom_call.1} parent=1 // pred_fallthru
      _
    // Predicated region
    $region10: #{tpu_custom_call.1} parent=1 // pred_check
      _
    $region11: #{tpu_custom_call.1} parent=1 // pred_check_branch
      %25 = sbr.rel (0) target = $region13
    $region12: #{tpu_custom_call.1} parent=1 // pred_region
      _
    $region13: #{tpu_custom_call.1} parent=1 // pred_fallthru
      _
    // Predicated region
    $region14: #{tpu_custom_call.1} parent=1 // pred_check
      _
    $region15: #{tpu_custom_call.1} parent=1 // pred_check_branch
      %27 = sbr.rel (0) target = $region17
    $region16: #{tpu_custom_call.1} parent=1 // pred_region
      %28 = dma.done [#allocation3], 128
    $region17: #{tpu_custom_call.1} parent=1 // pred_fallthru
      _
    %v29 = vld [vmem:[#allocation2] sm:$0xf]
    %v30 = vld [vmem:[#allocation2 + $0x4] sm:$0xf]
    %v31 = vunpack.c.l.bf16 %v29
    %v32 = vunpack.c.l.bf16 %v30
    %33 = vadd.xlane.f32.xlu0 %v31
    %v34 = vpop.xlane.xlu0 %33
    %35 = vadd.xlane.f32.xlu0 %v32
    %v36 = vpop.xlane.xlu0 %35
    %v37 = vrcp.pop 128.0
    %v38 = vmul.f32 %v34, %v37
    %v39 = vmul.f32 %v36, %v37
    %v40 = vsub.f32 %v31, %v38
    %v41 = vsub.f32 %v32, %v39
    %v42 = vmul.f32 %v40, %v40
    %v43 = vmul.f32 %v41, %v41
    %44 = vadd.xlane.f32.xlu0 %v42
    %v45 = vpop.xlane.xlu0 %44
    %46 = vadd.xlane.f32.xlu0 %v43
    %v47 = vpop.xlane.xlu0 %46
    %v48 = vmul.f32 %v45, %v37
    %v49 = vmul.f32 %v47, %v37
    %v50 = vadd.f32 %v48, 1e-12
    %v51 = vadd.f32 %v49, 1e-12
    %v52 = vrsqrt.pop %v50
    %v53 = vrsqrt.pop %v51
    %v54 = vmul.f32 %v40, %v52
    %v55 = vmul.f32 %v41, %v53
    %v56 = vld [vmem:[%s1] sm:$0x1]
    %v58 = vlaneseq
    %v59 = vshrl.u32 %v58, 7
    %v60 = vsub.s32 0, %v59
    %v61 = vrot.slane %v56, %v60
    %v63 = vmul.f32 %v54, %v61
    %v64 = vmul.f32 %v55, %v61
    %v65 = vld [vmem:[%s2] sm:$0x1]
    %v67 = vlaneseq
    %v68 = vshrl.u32 %v67, 7
    %v69 = vsub.s32 0, %v68
    %v70 = vrot.slane %v65, %v69
    %v72 = vadd.f32 %v63, %v70
    %v73 = vadd.f32 %v64, %v70
    %v74 = vpack.c.bf16 %v73, %v72
    %v76 = vunpack.c.l.b16 %v74
    %v77 = vunpack.c.h.b16 %v74
    %v78 = vpack.c.b16 %v76, %v76
    %v79 = vpack.c.b16 %v77, %v77
    %82 = vst [vmem:[#allocation5] sm:$0xf] %v78
    %83 = vst [vmem:[#allocation5 + $0x4] sm:$0xf] %v79
    // Predicated region
    $region18: #{tpu_custom_call.1} parent=1 // pred_check
      _
    $region19: #{tpu_custom_call.1} parent=1 // pred_check_branch
      %85 = sbr.rel (0) target = $region21
    $region20: #{tpu_custom_call.1} parent=1 // pred_region
      %s87 = ssub.s32 128, 128
      %88 = vsyncadd [#allocation4], %s87
      %s89 = sshll.u32 [#allocation5], 4
      %s90 = int_to_ptr.vmem [resolvable:$true] %s89
      %95 = dma.vmem_to_hbm [thread:$0]  %s90, 128, %s3, [#allocation4], 64, 64, 4
    $region21: #{tpu_custom_call.1} parent=1 // pred_fallthru
      _
    // Predicated region
    $region22: #{tpu_custom_call.1} parent=1 // pred_check
      _
    $region23: #{tpu_custom_call.1} parent=1 // pred_check_branch
      %97 = sbr.rel (0) target = $region25
    $region24: #{tpu_custom_call.1} parent=1 // pred_region
      %98 = dma.done [#allocation4], 128
    $region25: #{tpu_custom_call.1} parent=1 // pred_fallthru
      _
    %99 = vsyncpa [#allocation3], 1
    %100 = vsyncpa [#allocation4], 1

</llo_original>
